<compile_context>
chip_gen: v7x
topology: tpu7x:2x2x1
jax: 0.10.0
libtpu: 0.0.40
codegen_flags: <defaults>
</compile_context>

<pallas_src>
from functools import partial

import jax
import jax.numpy as jnp
from jax import lax
from jax.experimental import pallas as pl
from jax.experimental.pallas import tpu as pltpu


# VMEM budget (bytes) for the x/out double-buffers: 2 arrays x 2 buffers.
_TILE_VMEM_BUDGET = 16 * 1024 * 1024
# Scoped VMEM limit handed to Mosaic (safe on v5e/v6e/v7x; v7x has 64 MiB/TC).
_VMEM_LIMIT_BYTES = 48 * 1024 * 1024


def _round_up(x: int, m: int) -> int:
    return (x + m - 1) // m * m


def _layer_norm_fwd_kernel(*refs, eps, true_d, has_weight, has_bias, need_mask):
    # refs = (x_ref, [w_ref], [b_ref], o_ref)
    x_ref = refs[0]
    idx = 1
    w_ref = None
    b_ref = None
    if has_weight:
        w_ref = refs[idx]
        idx += 1
    if has_bias:
        b_ref = refs[idx]
        idx += 1
    o_ref = refs[idx]

    x = x_ref[...].astype(jnp.float32)  # (bt, Dp)

    if need_mask:
        lane = lax.broadcasted_iota(jnp.int32, x.shape, dimension=1)
        mask = lane < true_d
        x = jnp.where(mask, x, 0.0)

    inv_d = jnp.float32(1.0 / true_d)
    mean = jnp.sum(x, axis=-1, keepdims=True) * inv_d           # (bt, 1)
    xbar = x - mean
    if need_mask:
        xbar = jnp.where(mask, xbar, 0.0)
    var = jnp.sum(xbar * xbar, axis=-1, keepdims=True) * inv_d  # (bt, 1)
    rstd = lax.rsqrt(var + eps)                                  # (bt, 1)

    y = xbar * rstd                                              # (bt, Dp)
    if has_weight:
        y = y * w_ref[...].astype(jnp.float32)                   # broadcast (1, Dp)
    if has_bias:
        y = y + b_ref[...].astype(jnp.float32)

    o_ref[...] = y.astype(o_ref.dtype)


def layer_norm_pallas(x, weight=None, bias=None, eps: float = 1e-5,
                      block_t: int | None = None):
    """Forward-only LayerNorm matching fla LayerNorm.forward (no residual)."""
    x_shape_og = x.shape
    D = x.shape[-1]
    x2 = x.reshape(-1, D)
    T = x2.shape[0]

    has_weight = weight is not None
    has_bias = bias is not None

    itemsize = jnp.dtype(x.dtype).itemsize
    # Sublane packing: f32 -> 8 rows/vreg, bf16 -> 16, int8/fp8 -> 32.
    sub = {4: 8, 2: 16, 1: 32}.get(itemsize, 8)

    # Lane-dense hidden dim: pad to a multiple of 128.
    Dp = _round_up(D, 128)
    need_mask = Dp != D

    # Row tile sized against the VMEM budget (in + out, double-buffered),
    # always a multiple of the sublane packing, never degraded below it.
    if block_t is None:
        bt = _TILE_VMEM_BUDGET // (4 * Dp * itemsize)
    else:
        bt = block_t
    bt = max(sub, min(bt, 1024))
    bt = (bt // sub) * sub
    bt = min(bt, _round_up(T, sub))       # don't over-pad tiny inputs

    grid_t = pl.cdiv(T, bt)
    T_pad = grid_t * bt

    # Pad rows (extra rows are all-zero -> finite outputs, sliced away) and
    # pad the hidden dim to the lane-dense width.
    if T_pad != T or need_mask:
        x2 = jnp.pad(x2, ((0, T_pad - T), (0, Dp - D)))

    operands = [x2]
    in_specs = [pl.BlockSpec((bt, Dp), lambda i: (i, 0))]
    if has_weight:
        w2 = weight.reshape(1, D)
        if need_mask:
            w2 = jnp.pad(w2, ((0, 0), (0, Dp - D)))
        operands.append(w2)
        in_specs.append(pl.BlockSpec((1, Dp), lambda i: (0, 0)))
    if has_bias:
        b2 = bias.reshape(1, D)
        if need_mask:
            b2 = jnp.pad(b2, ((0, 0), (0, Dp - D)))
        operands.append(b2)
        in_specs.append(pl.BlockSpec((1, Dp), lambda i: (0, 0)))

    kernel = partial(
        _layer_norm_fwd_kernel,
        eps=eps,
        true_d=D,
        has_weight=has_weight,
        has_bias=has_bias,
        need_mask=need_mask,
    )

    y2 = pl.pallas_call(
        kernel,
        out_shape=jax.ShapeDtypeStruct((T_pad, Dp), x.dtype),
        grid_spec=pltpu.PrefetchScalarGridSpec(
            num_scalar_prefetch=0,
            grid=(grid_t,),
            in_specs=in_specs,
            out_specs=pl.BlockSpec((bt, Dp), lambda i: (i, 0)),
        ),
        compiler_params=pltpu.CompilerParams(
            dimension_semantics=("parallel",),
            vmem_limit_bytes=_VMEM_LIMIT_BYTES,
        ),
    )(*operands)

    if T_pad != T or need_mask:
        y2 = y2[:T, :D]
    return y2.reshape(x_shape_og)


class LayerNorm:
    """JAX/Pallas port of fla.modules.layernorm.LayerNorm (forward only)."""

    def __init__(self, hidden_size: int, elementwise_affine: bool = True,
                 bias: bool = False, eps: float = 1e-5):
        self.hidden_size = hidden_size
        self.elementwise_affine = elementwise_affine
        self.eps = eps
        self.weight = None
        self.bias = None
        if elementwise_affine:
            # Same as reset_parameters(): ones / zeros.
            self.weight = jnp.ones((hidden_size,), jnp.float32)
            if bias:
                self.bias = jnp.zeros((hidden_size,), jnp.float32)

    def __call__(self, x, residual=None, prenorm=False, residual_in_fp32=False):
        if residual is not None:
            # TODO(synk): residual-add / prenorm path not needed for default forward.
            raise NotImplementedError("residual path not implemented")
        return layer_norm_pallas(x, self.weight, self.bias, eps=self.eps)


if __name__ == "__main__":
    batch, seq, hidden = 2, 8, 32
    key = jax.random.PRNGKey(0)
    x = jax.random.normal(key, (batch, seq, hidden), dtype=jnp.float32)

    ln = LayerNorm(hidden_size=hidden, elementwise_affine=True, bias=False, eps=1e-5)
    y = ln(x)
    y = jax.block_until_ready(y)

    # Pure-JAX reference check.
    xf = x.astype(jnp.float32)
    mean = jnp.mean(xf, axis=-1, keepdims=True)
    var = jnp.mean((xf - mean) ** 2, axis=-1, keepdims=True)
    y_ref = (xf - mean) * lax.rsqrt(var + 1e-5) * ln.weight
    assert y.shape == x.shape
    assert jnp.allclose(y, y_ref.astype(y.dtype), atol=1e-5, rtol=1e-5)

    # Also exercise the bias path and a ragged row count.
    ln_b = LayerNorm(hidden_size=hidden, elementwise_affine=True, bias=True, eps=1e-5)
    x_r = jax.random.normal(jax.random.PRNGKey(1), (3, 5, hidden), dtype=jnp.float32)
    y_b = jax.block_until_ready(ln_b(x_r))
    xf = x_r.astype(jnp.float32)
    mean = jnp.mean(xf, axis=-1, keepdims=True)
    var = jnp.mean((xf - mean) ** 2, axis=-1, keepdims=True)
    y_b_ref = (xf - mean) * lax.rsqrt(var + 1e-5) * ln_b.weight + ln_b.bias
    assert jnp.allclose(y_b, y_b_ref.astype(y_b.dtype), atol=1e-5, rtol=1e-5)

    print("KERNEL_OK")
</pallas_src>

<mosaic_0001>
module attributes {stable_mosaic.version = 11 : i64} {
  func.func @_layer_norm_fwd_kernel(%arg0: i32, %arg1: memref<16x128xf32, #tpu.memory_space<vmem>>, %arg2: memref<1x128xf32, #tpu.memory_space<vmem>>, %arg3: memref<16x128xf32, #tpu.memory_space<vmem>>) attributes {dimension_semantics = [#tpu.dimension_semantics<parallel>], iteration_bounds = array<i64: 1>, scalar_prefetch = 0 : i64, scratch_operands = 0 : i64, tpu.core_type = #tpu.core_type<tc>, window_params = [{transform_indices = @transform_0, window_bounds = array<i64: 16, 128>}, {pipeline_mode = #tpu.pipeline_mode<synchronous>, transform_indices = @transform_1, window_bounds = array<i64: 1, 128>}, {transform_indices = @transform_2, window_bounds = array<i64: 16, 128>}]} {
    %c0 = arith.constant 0 : index
    %c0_0 = arith.constant 0 : index
    %0 = vector.load %arg1[%c0, %c0_0] : memref<16x128xf32, #tpu.memory_space<vmem>>, vector<16x128xf32>
    %1 = tpu.iota {dimensions = array<i32: 1>} : vector<16x128xi32>
    %c32_i32 = arith.constant 32 : i32
    %2 = vector.broadcast %c32_i32 : i32 to vector<16x128xi32>
    %3 = arith.cmpi slt, %1, %2 : vector<16x128xi32>
    %cst = arith.constant 0.000000e+00 : f32
    %4 = vector.broadcast %cst : f32 to vector<16x128xf32>
    %5 = arith.select %3, %0, %4 : vector<16x128xi1>, vector<16x128xf32>
    %cst_1 = arith.constant dense<0.000000e+00> : vector<16xf32>
    %6 = vector.multi_reduction <add>, %5, %cst_1 [1] : vector<16x128xf32> to vector<16xf32>
    %7 = vector.shape_cast %6 : vector<16xf32> to vector<16x1xf32>
    %cst_2 = arith.constant 3.125000e-02 : f32
    %8 = vector.broadcast %cst_2 : f32 to vector<16x1xf32>
    %9 = arith.mulf %7, %8 : vector<16x1xf32>
    %10 = vector.broadcast %9 : vector<16x1xf32> to vector<16x128xf32>
    %11 = arith.subf %5, %10 : vector<16x128xf32>
    %cst_3 = arith.constant 0.000000e+00 : f32
    %12 = vector.broadcast %cst_3 : f32 to vector<16x128xf32>
    %13 = arith.select %3, %11, %12 : vector<16x128xi1>, vector<16x128xf32>
    %14 = arith.mulf %13, %13 : vector<16x128xf32>
    %cst_4 = arith.constant dense<0.000000e+00> : vector<16xf32>
    %15 = vector.multi_reduction <add>, %14, %cst_4 [1] : vector<16x128xf32> to vector<16xf32>
    %16 = vector.shape_cast %15 : vector<16xf32> to vector<16x1xf32>
    %cst_5 = arith.constant 3.125000e-02 : f32
    %17 = vector.broadcast %cst_5 : f32 to vector<16x1xf32>
    %18 = arith.mulf %16, %17 : vector<16x1xf32>
    %cst_6 = arith.constant 9.99999974E-6 : f32
    %19 = vector.broadcast %cst_6 : f32 to vector<16x1xf32>
    %20 = arith.addf %18, %19 : vector<16x1xf32>
    %21 = math.rsqrt %20 : vector<16x1xf32>
    %22 = vector.broadcast %21 : vector<16x1xf32> to vector<16x128xf32>
    %23 = arith.mulf %13, %22 : vector<16x128xf32>
    %c0_7 = arith.constant 0 : index
    %c0_8 = arith.constant 0 : index
    %24 = vector.load %arg2[%c0_7, %c0_8] : memref<1x128xf32, #tpu.memory_space<vmem>>, vector<1x128xf32>
    %25 = vector.broadcast %24 : vector<1x128xf32> to vector<16x128xf32>
    %26 = arith.mulf %23, %25 : vector<16x128xf32>
    %c0_9 = arith.constant 0 : index
    %c0_10 = arith.constant 0 : index
    %27 = vector.load %arg3[%c0_9, %c0_10] : memref<16x128xf32, #tpu.memory_space<vmem>>, vector<16x128xf32>
    tpu.vector_store %arg3[%c0_9, %c0_10], %26 {strides = array<i32>} : memref<16x128xf32, #tpu.memory_space<vmem>>, vector<16x128xf32>,
    return
  }
  func.func @transform_0(%arg0: i32) -> (i32, i32) {
    %c0_i32 = arith.constant 0 : i32
    %c0_i32_0 = arith.constant 0 : i32
    return %arg0, %c0_i32 : i32, i32
  }
  func.func @transform_1(%arg0: i32) -> (i32, i32) {
    %c0_i32 = arith.constant 0 : i32
    %c0_i32_0 = arith.constant 0 : i32
    %c0_i32_1 = arith.constant 0 : i32
    return %c0_i32, %c0_i32_0 : i32, i32
  }
  func.func @transform_2(%arg0: i32) -> (i32, i32) {
    %c0_i32 = arith.constant 0 : i32
    %c0_i32_0 = arith.constant 0 : i32
    return %arg0, %c0_i32 : i32, i32
  }
}

</mosaic_0001>

<llo_original>
// kernel: tpu_custom_call.1
$region0: #{tpu_custom_call.1}
  #allocation0 [shape = 'u32[]', space=smem, size = 0x4, offset = 0x4, fixed_abs, tag = 'smem constant byte address 0x4 - core index']
  #allocation1 [shape = 'u32[144,128]{1,0:T(1,128)}', space=vmem, size = 0x12000, scoped, tag = 'internal scratch']
  %s0 = inlined_call_operand.hbm [shape: f32[16,128], index: 0, kind: input, shape index: {}]
  %s1 = inlined_call_operand.vmem [shape: f32[1,128], index: 1, kind: input, shape index: {}]
  %s2 = inlined_call_operand.hbm [shape: f32[16,128], index: 2, kind: output, shape index: {}]
  %s3 = sld [smem:[#allocation0]]
  $region22: #{tpu_custom_call.1} parent=0
    _
  %s5 = ssub.s32 1, %s3
  %s6 = scalar_select 0, %s5, %s3
  $region1: #{tpu_custom_call.1} parent=0
    #allocation2 [shape = 'u8[8192]{0}', space=vmem, size = 0x2000, scoped, tag = 'input window, operand 0, single buffered']
    #allocation3 [shape = 's32[1]{0}', space=sflag, size = 0x4, scoped, tag = 'scoped memory for tpu_custom_call.1']
    #allocation4 [shape = 's32[1]{0}', space=sflag, size = 0x4, scoped, tag = 'scoped memory for tpu_custom_call.1']
    #allocation5 [shape = 'u8[8192]{0}', space=vmem, size = 0x2000, scoped, tag = 'output window, operand 0, single buffered']
    %7 = vsyncpa [#allocation3], 0
    %8 = vsyncpa [#allocation4], 0
    // Predicated region
    $region2: #{tpu_custom_call.1} parent=1 // pred_check
      _
    $region3: #{tpu_custom_call.1} parent=1 // pred_check_branch
      %10 = sbr.rel (0) target = $region5
    $region4: #{tpu_custom_call.1} parent=1 // pred_region
      %s12 = ssub.s32 256, 256
      %13 = vsyncadd [#allocation3], %s12
      %s14 = sshll.u32 [#allocation2], 4
      %s15 = int_to_ptr.vmem [resolvable:$true] %s14
      %20 = dma.hbm_to_vmem [thread:$0]  %s0, 256, %s15, [#allocation3], 128, 128, 8
    $region5: #{tpu_custom_call.1} parent=1 // pred_fallthru
      _
    // Predicated region
    $region6: #{tpu_custom_call.1} parent=1 // pred_check
      _
    $region7: #{tpu_custom_call.1} parent=1 // pred_check_branch
      %22 = sbr.rel (0) target = $region9
    $region8: #{tpu_custom_call.1} parent=1 // pred_region
      _
    $region9: #{tpu_custom_call.1} parent=1 // pred_fallthru
      _
    // Predicated region
    $region10: #{tpu_custom_call.1} parent=1 // pred_check
      _
    $region11: #{tpu_custom_call.1} parent=1 // pred_check_branch
      %24 = sbr.rel (0) target = $region13
    $region12: #{tpu_custom_call.1} parent=1 // pred_region
      %25 = dma.done [#allocation3], 256
    $region13: #{tpu_custom_call.1} parent=1 // pred_fallthru
      _
    %v26 = vld [vmem:[#allocation2] sm:$0xff]
    %v27 = vld [vmem:[#allocation2 + $0x8] sm:$0xff]
    %v28 = vlaneseq
    %v29 = vand.u32 %v28, 127
    %vm30 = vcmp.lt.s32.totalorder %v29, 32
    %v31 = vsel %vm30, %v26, 0.0
    %v32 = vsel %vm30, %v27, 0.0
    %33 = vadd.xlane.f32.xlu0 %v31
    %v34 = vpop.xlane.xlu0 %33
    %35 = vadd.xlane.f32.xlu0 %v32
    %v36 = vpop.xlane.xlu0 %35
    %v37 = vmul.f32 %v34, 0.03125
    %v38 = vmul.f32 %v36, 0.03125
    %v39 = vsub.f32 %v31, %v37
    %v40 = vsub.f32 %v32, %v38
    %v41 = vsel %vm30, %v39, 0.0
    %v42 = vsel %vm30, %v40, 0.0
    %v43 = vmul.f32 %v41, %v41
    %v44 = vmul.f32 %v42, %v42
    %45 = vadd.xlane.f32.xlu0 %v43
    %v46 = vpop.xlane.xlu0 %45
    %47 = vadd.xlane.f32.xlu0 %v44
    %v48 = vpop.xlane.xlu0 %47
    %v49 = vmul.f32 %v46, 0.03125
    %v50 = vmul.f32 %v48, 0.03125
    %v51 = vadd.f32 %v49, 1e-05
    %v52 = vadd.f32 %v50, 1e-05
    %v53 = vrsqrt.pop %v51
    %v54 = vrsqrt.pop %v52
    %v55 = vmul.f32 %v41, %v53
    %v56 = vmul.f32 %v42, %v54
    %v57 = vld [vmem:[%s1] sm:$0x1]
    %v59 = vlaneseq
    %v60 = vshrl.u32 %v59, 7
    %v61 = vsub.s32 0, %v60
    %v62 = vrot.slane %v57, %v61
    %v64 = vmul.f32 %v55, %v62
    %v65 = vmul.f32 %v56, %v62
    %66 = vst [vmem:[#allocation5] sm:$0xff] %v64
    %67 = vst [vmem:[#allocation5 + $0x8] sm:$0xff] %v65
    // Predicated region
    $region14: #{tpu_custom_call.1} parent=1 // pred_check
      _
    $region15: #{tpu_custom_call.1} parent=1 // pred_check_branch
      %69 = sbr.rel (0) target = $region17
    $region16: #{tpu_custom_call.1} parent=1 // pred_region
      %s71 = ssub.s32 256, 256
      %72 = vsyncadd [#allocation4], %s71
      %s73 = sshll.u32 [#allocation5], 4
      %s74 = int_to_ptr.vmem [resolvable:$true] %s73
      %79 = dma.vmem_to_hbm [thread:$0]  %s74, 256, %s2, [#allocation4], 128, 128, 8
    $region17: #{tpu_custom_call.1} parent=1 // pred_fallthru
      _
    // Predicated region
    $region18: #{tpu_custom_call.1} parent=1 // pred_check
      _
    $region19: #{tpu_custom_call.1} parent=1 // pred_check_branch
      %81 = sbr.rel (0) target = $region21
    $region20: #{tpu_custom_call.1} parent=1 // pred_region
      %82 = dma.done [#allocation4], 256
    $region21: #{tpu_custom_call.1} parent=1 // pred_fallthru
      _
    %83 = vsyncpa [#allocation3], 1
    %84 = vsyncpa [#allocation4], 1

</llo_original>
